<compile_context>
chip_gen: v7x
topology: tpu7x:2x2x1
jax: 0.10.0
libtpu: 0.0.40
codegen_flags: <defaults>
</compile_context>

<pallas_src>
import functools
import math

import jax
import jax.numpy as jnp
from jax.experimental import pallas as pl
from jax.experimental.pallas import tpu as pltpu


# ----------------------------- device helpers -----------------------------

def _device_kind():
    try:
        return jax.devices()[0].device_kind.lower()
    except Exception:
        return ""


def _elementwise_dtype():
    # bf16 VPU/EUP exists on v6e/v7x; v5e (and older) must do elementwise math in f32.
    kind = _device_kind()
    return jnp.bfloat16 if ("v6" in kind or "v7" in kind) else jnp.float32


def _pick_m_tile(tokens_per_group):
    # v7x has 64 MiB VMEM per TensorCore -> cap the M tile lower than v5e/v6e (128 MiB).
    cap = 512 if "v7" in _device_kind() else 2048
    tm = min(tokens_per_group, cap)
    if tokens_per_group % tm != 0:
        tm = math.gcd(tokens_per_group, tm)
    return tm


# ----------------------------- Pallas kernel -----------------------------

def _fused_gencd_kernel(sig_ref, xp_ref, noi_ref, cond_ref, wv_ref,
                        w1_ref, w2_ref, b2_ref, o_ref, *, inv_count, ew_dtype):
    # Grid = (Bg, S // tm); both axes parallel (each step owns its output block).
    g = pl.program_id(0)
    sigma = sig_ref[g]                                            # scalar f32 from SMEM

    # Synthetic VAE: 16x16-pixel patch projection straight to packed token channels
    # (8x8 patchify, VAE scaling factor and 2x2 pack_latents all folded into wv).
    lat = jnp.dot(xp_ref[...], wv_ref[...],
                  preferred_element_type=jnp.float32)             # (tm, C4) f32
    noi = noi_ref[...].astype(jnp.float32)                        # (tm, C4) f32

    # Flow-matching lerp; loss path stays f32 (these are small (tm, C4) arrays).
    noisy = (1.0 - sigma) * lat + sigma * noi

    # FLUX-transformer stand-in: token-wise MLP conditioned on
    # (timestep, guidance, pooled CLIP, mean T5); b1 is pre-folded into cond.
    h = jnp.dot(noisy.astype(jnp.bfloat16), w1_ref[...],
                preferred_element_type=jnp.float32)               # (tm, D) f32
    h = h + cond_ref[0]                                           # (1, D) broadcast
    # The (tm, D) gelu is the binding VPU/EUP slot at scale: bf16 on v6e/v7x, f32 on v5e.
    h = jax.nn.gelu(h.astype(ew_dtype))
    pred = jnp.dot(h.astype(jnp.bfloat16), w2_ref[...],
                   preferred_element_type=jnp.float32) + b2_ref[...]   # (tm, C4) f32

    # Flow-matching target and squared error -> lane-dense per-tile partial sum.
    diff = pred - (noi - lat)
    total = jnp.sum(diff * diff) * inv_count
    o_ref[...] = jnp.full(o_ref.shape, total, dtype=jnp.float32)


# ----------------------------- Pallas wrapper -----------------------------

def fused_gencd_loss_pallas(xp, noise_tok, sigmas, cond, w_tok, params, *,
                            tokens_per_group, inv_count):
    # xp: (M, K) bf16 pixel patches (token order); noise_tok: (M, C4) bf16;
    # sigmas: (Bg,) f32 (scalar prefetch -> SMEM); cond: (Bg, 1, D) f32.
    M, K = xp.shape
    C4 = noise_tok.shape[1]
    Bg, _, D = cond.shape
    S = tokens_per_group
    tm = _pick_m_tile(S)
    n_m = S // tm
    G = Bg * n_m
    ew_dtype = _elementwise_dtype()

    kernel = functools.partial(_fused_gencd_kernel, inv_count=inv_count,
                               ew_dtype=ew_dtype)

    grid_spec = pltpu.PrefetchScalarGridSpec(
        num_scalar_prefetch=1,                 # sigmas -> SMEM, visible to index_maps + kernel
        grid=(Bg, n_m),
        in_specs=[
            pl.BlockSpec((tm, K), lambda g, m, sig: (g * n_m + m, 0)),     # pixel patches
            pl.BlockSpec((tm, C4), lambda g, m, sig: (g * n_m + m, 0)),    # noise tokens
            pl.BlockSpec((1, 1, D), lambda g, m, sig: (g, 0, 0)),          # per-group cond
            pl.BlockSpec((K, C4), lambda g, m, sig: (0, 0)),               # VAE/pack weight (resident)
            pl.BlockSpec((C4, D), lambda g, m, sig: (0, 0)),               # w1 (resident)
            pl.BlockSpec((D, C4), lambda g, m, sig: (0, 0)),               # w2 (resident)
            pl.BlockSpec((1, C4), lambda g, m, sig: (0, 0)),               # b2 (resident)
        ],
        out_specs=pl.BlockSpec((1, 8, 128), lambda g, m, sig: (g * n_m + m, 0, 0)),
    )

    partials = pl.pallas_call(
        kernel,
        grid_spec=grid_spec,
        out_shape=jax.ShapeDtypeStruct((G, 8, 128), jnp.float32),
        compiler_params=pltpu.CompilerParams(
            dimension_semantics=("parallel", "parallel"),
            vmem_limit_bytes=32 * 1024 * 1024,
        ),
    )(
        sigmas.astype(jnp.float32),
        xp.astype(jnp.bfloat16),
        noise_tok.astype(jnp.bfloat16),
        cond.astype(jnp.float32),
        w_tok.astype(jnp.bfloat16),
        params["w1"].astype(jnp.bfloat16),
        params["w2"].astype(jnp.bfloat16),
        params["b2"].astype(jnp.float32),
    )
    # Per-tile partial sums (already scaled by inv_count) -> scalar loss.
    return jnp.sum(partials[:, 0, 0])


# ----------------------------- JAX glue (matches reference math) -----------------------------

def calculate_shift_flux(image_seq_len, base_seq_len=256, max_seq_len=4096,
                         base_shift=0.5, max_shift=1.15):
    m = (max_shift - base_shift) / (max_seq_len - base_seq_len)
    b = base_shift - m * base_seq_len
    return image_seq_len * m + b


def apply_flux_schedule_shift(sigmas, noise_shape):
    image_seq_len = noise_shape[-1] * noise_shape[-2] // 4
    mu = calculate_shift_flux(image_seq_len)
    shift = math.exp(mu)
    return sigmas * shift / (1 + (shift - 1) * sigmas)


def prepare_latent_image_ids(height, width, dtype):
    ids = jnp.zeros((height // 2, width // 2, 3), jnp.float32)
    ids = ids.at[..., 1].add(jnp.arange(height // 2)[:, None])
    ids = ids.at[..., 2].add(jnp.arange(width // 2)[None, :])
    return ids.reshape((height // 2) * (width // 2), 3).astype(dtype)


def build_vae_token_weight(w_vae, scaling_factor=0.3611, patch=8,
                           latent_channels=16, in_ch=3):
    """Fold the 8x8-patch VAE projection, the VAE scaling factor and the 2x2
    pack_latents packing into one (in_ch*16*16, 4*latent_channels) weight so the
    kernel's first matmul emits packed token channels (c*4 + dh*2 + dw) directly."""
    w4 = w_vae.reshape(in_ch, patch, patch, latent_channels).astype(jnp.float32)
    p2 = 2 * patch
    wb = jnp.zeros((in_ch, p2, p2, latent_channels, 2, 2), jnp.float32)
    for dh in range(2):
        for dw in range(2):
            wb = wb.at[:, dh * patch:(dh + 1) * patch,
                       dw * patch:(dw + 1) * patch, :, dh, dw].set(w4)
    return (wb * scaling_factor).reshape(in_ch * p2 * p2, latent_channels * 4)


def init_params(key, in_ch=3, patch=8, latent_channels=16, token_dim=64,
                d_model=128, t5_dim=32, clip_dim=32):
    ks = jax.random.split(key, 6)
    return {
        "vae_w": jax.random.normal(ks[0], (in_ch * patch * patch, latent_channels), jnp.float32) * 0.02,
        "w1": jax.random.normal(ks[1], (token_dim, d_model), jnp.float32) * 0.02,
        "b1": jnp.zeros((1, d_model), jnp.float32),
        "w2": jax.random.normal(ks[2], (d_model, token_dim), jnp.float32) * 0.02,
        "b2": jnp.zeros((1, token_dim), jnp.float32),
        "w_txt": jax.random.normal(ks[3], (t5_dim, d_model), jnp.float32) * 0.02,
        "w_pool": jax.random.normal(ks[4], (clip_dim, d_model), jnp.float32) * 0.02,
        "w_tg": jax.random.normal(ks[5], (2, d_model), jnp.float32) * 0.02,
    }


def gencd_forward(params, images, masks, key, num=2):
    # TODO(synk): real AutoencoderKL / CLIP / T5 / FLUX transformer (and tokenizers)
    #             are replaced by small deterministic stand-ins.
    del masks  # TODO(synk): joint_attention_kwargs (masks, shared_attn) have no effect on the token-wise stand-in.
    dtype = jnp.bfloat16
    B, in_ch, H_px, W_px = images.shape
    assert B % num == 0
    Bg = B // num
    k_noise, k_sig, k_txt, k_pool = jax.random.split(key, 4)

    patch, C = 8, 16
    h, w = H_px // patch, W_px // patch                 # latent spatial per sample
    H, W = h, num * w                                   # grouped latent layout 'b c h (n w)'
    H1, W1 = h // 2, w // 2                             # packed token grid per sample
    S = H1 * W1                                         # tokens per group kept (n == 0 only)
    C4 = 4 * C
    M = Bg * S
    D = params["w1"].shape[1]

    # regularization coin-flip fixed to False for determinism (prob=0.1 in reference).

    # Only first-of-group (n == 0) samples contribute to the loss; the reference's
    # rearrange/noise-override/mask chain reduces to selecting exactly these tokens
    # (stand-in only: a real attention transformer would couple n==1 tokens in).
    x0 = images[0::num].astype(dtype)                   # (Bg, 3, H_px, W_px)
    p2 = 2 * patch                                      # 16x16 pixel patch == one packed token
    xp = x0.reshape(Bg, in_ch, H1, p2, W1, p2).transpose(0, 2, 4, 1, 3, 5)
    xp = xp.reshape(M, in_ch * p2 * p2)                 # (M, 768) bf16, token row order

    w_tok = build_vae_token_weight(params["vae_w"], 0.3611, patch, C, in_ch)

    # Flow-matching noise drawn directly in token layout (iid gaussian, so the packing
    # permutation is statistically irrelevant); bf16 like the reference randn_like.
    noise_tok = jax.random.normal(k_noise, (M, C4), jnp.float32).astype(dtype)

    sigmas = jax.random.beta(k_sig, 4.0, 2.0, (Bg,), jnp.float32)       # Beta(4, 2) schedule
    sigmas = apply_flux_schedule_shift(sigmas, (Bg, C, H, W))
    timesteps = sigmas * 1000.0

    # Synthetic deterministic stand-ins for the frozen CLIP / T5 text encoders.
    prompt_embeds = jax.random.normal(k_txt, (Bg, 8, 32), jnp.float32)
    pooled_prompt_embeds = jax.random.normal(k_pool, (Bg, 32), jnp.float32)
    guidance = jnp.full((Bg,), 1.0, jnp.float32)

    _img_ids = prepare_latent_image_ids(H, W, dtype)    # TODO(synk): RoPE ids unused by the MLP stand-in.

    # Per-group conditioning row (timestep / guidance / pooled CLIP / mean-T5), b1 folded in.
    cond = (jnp.mean(prompt_embeds, axis=1) @ params["w_txt"]
            + pooled_prompt_embeds @ params["w_pool"]
            + jnp.stack([timesteps / 1000.0, guidance], axis=-1) @ params["w_tg"]
            + params["b1"])                             # (Bg, D) f32
    cond = cond.reshape(Bg, 1, D)

    inv_count = 1.0 / float(M * C4)                     # == mean over the reference's selected elements
    return fused_gencd_loss_pallas(xp, noise_tok, sigmas, cond, w_tok, params,
                                   tokens_per_group=S, inv_count=inv_count)


if __name__ == "__main__":
    key = jax.random.PRNGKey(0)
    k_param, k_img, k_fwd = jax.random.split(key, 3)
    B, num = 4, 2
    x = jax.random.normal(k_img, (B, 3, 64, 64), jnp.float32)           # batch['images'], NCHW
    masks = jnp.ones((B, 1, 64, 64), jnp.float32)                        # batch['masks'] (unused by stand-in)
    params = init_params(k_param)

    loss = gencd_forward(params, x, masks, k_fwd, num=num)
    loss = jax.block_until_ready(loss)
    assert loss.shape == () and bool(jnp.isfinite(loss))
    print("KERNEL_OK")
</pallas_src>

<mosaic_0001>
module attributes {stable_mosaic.version = 11 : i64} {
  func.func @_fused_gencd_kernel(%arg0: i32, %arg1: i32, %arg2: memref<2xf32, #tpu.memory_space<smem>>, %arg3: memref<16x768xbf16, #tpu.memory_space<vmem>>, %arg4: memref<16x64xbf16, #tpu.memory_space<vmem>>, %arg5: memref<1x1x128xf32, #tpu.memory_space<vmem>>, %arg6: memref<768x64xbf16, #tpu.memory_space<vmem>>, %arg7: memref<64x128xbf16, #tpu.memory_space<vmem>>, %arg8: memref<128x64xbf16, #tpu.memory_space<vmem>>, %arg9: memref<1x64xf32, #tpu.memory_space<vmem>>, %arg10: memref<1x8x128xf32, #tpu.memory_space<vmem>>) attributes {dimension_semantics = [#tpu.dimension_semantics<parallel>, #tpu.dimension_semantics<parallel>], iteration_bounds = array<i64: 2, 1>, scalar_prefetch = 1 : i64, scratch_operands = 0 : i64, tpu.core_type = #tpu.core_type<tc>, window_params = [{transform_indices = @transform_0, window_bounds = array<i64: 16, 768>}, {transform_indices = @transform_1, window_bounds = array<i64: 16, 64>}, {transform_indices = @transform_2, window_bounds = array<i64: 1, 1, 128>}, {pipeline_mode = #tpu.pipeline_mode<synchronous>, transform_indices = @transform_3, window_bounds = array<i64: 768, 64>}, {pipeline_mode = #tpu.pipeline_mode<synchronous>, transform_indices = @transform_4, window_bounds = array<i64: 64, 128>}, {pipeline_mode = #tpu.pipeline_mode<synchronous>, transform_indices = @transform_5, window_bounds = array<i64: 128, 64>}, {pipeline_mode = #tpu.pipeline_mode<synchronous>, transform_indices = @transform_6, window_bounds = array<i64: 1, 64>}, {transform_indices = @transform_7, window_bounds = array<i64: 1, 8, 128>}]} {
    %0 = arith.index_cast %arg0 : i32 to index
    %1 = memref.load %arg2[%0] : memref<2xf32, #tpu.memory_space<smem>>
    %c0 = arith.constant 0 : index
    %c0_0 = arith.constant 0 : index
    %2 = vector.load %arg3[%c0, %c0_0] : memref<16x768xbf16, #tpu.memory_space<vmem>>, vector<16x768xbf16>
    %c0_1 = arith.constant 0 : index
    %c0_2 = arith.constant 0 : index
    %3 = vector.load %arg6[%c0_1, %c0_2] : memref<768x64xbf16, #tpu.memory_space<vmem>>, vector<768x64xbf16>
    %cst = arith.constant dense<0.000000e+00> : vector<16x64xf32>
    %4 = tpu.matmul %2, %3, %cst {dimension_numbers = #tpu.dot_dimension_numbers<[1], [0], [0], [1], [0, 0, 1, 1], [], []>} : vector<16x768xbf16>, vector<768x64xbf16>, vector<16x64xf32> -> vector<16x64xf32>
    %c0_3 = arith.constant 0 : index
    %c0_4 = arith.constant 0 : index
    %5 = vector.load %arg4[%c0_3, %c0_4] : memref<16x64xbf16, #tpu.memory_space<vmem>>, vector<16x64xbf16>
    %6 = arith.extf %5 : vector<16x64xbf16> to vector<16x64xf32>
    %cst_5 = arith.constant 1.000000e+00 : f32
    %7 = arith.subf %cst_5, %1 : f32
    %8 = vector.broadcast %7 : f32 to vector<16x64xf32>
    %9 = arith.mulf %8, %4 : vector<16x64xf32>
    %10 = vector.broadcast %1 : f32 to vector<16x64xf32>
    %11 = arith.mulf %10, %6 : vector<16x64xf32>
    %12 = arith.addf %9, %11 : vector<16x64xf32>
    %13 = arith.truncf %12 : vector<16x64xf32> to vector<16x64xbf16>
    %c0_6 = arith.constant 0 : index
    %c0_7 = arith.constant 0 : index
    %14 = vector.load %arg7[%c0_6, %c0_7] : memref<64x128xbf16, #tpu.memory_space<vmem>>, vector<64x128xbf16>
    %cst_8 = arith.constant dense<0.000000e+00> : vector<16x128xf32>
    %15 = tpu.matmul %13, %14, %cst_8 {dimension_numbers = #tpu.dot_dimension_numbers<[1], [0], [0], [1], [0, 0, 1, 1], [], []>} : vector<16x64xbf16>, vector<64x128xbf16>, vector<16x128xf32> -> vector<16x128xf32>
    %c0_9 = arith.constant 0 : index
    %c0_10 = arith.constant 0 : index
    %c0_11 = arith.constant 0 : index
    %16 = vector.load %arg5[%c0_9, %c0_10, %c0_11] : memref<1x1x128xf32, #tpu.memory_space<vmem>>, vector<1x1x128xf32>
    %17 = vector.shape_cast %16 : vector<1x1x128xf32> to vector<1x128xf32>
    %18 = vector.broadcast %17 : vector<1x128xf32> to vector<16x128xf32>
    %19 = arith.addf %15, %18 : vector<16x128xf32>
    %20 = arith.mulf %19, %19 : vector<16x128xf32>
    %21 = arith.mulf %19, %20 : vector<16x128xf32>
    %cst_12 = arith.constant 4.471500e-02 : f32
    %22 = vector.broadcast %cst_12 : f32 to vector<16x128xf32>
    %23 = arith.mulf %22, %21 : vector<16x128xf32>
    %24 = arith.addf %19, %23 : vector<16x128xf32>
    %cst_13 = arith.constant 0.797884583 : f32
    %25 = vector.broadcast %cst_13 : f32 to vector<16x128xf32>
    %26 = arith.mulf %25, %24 : vector<16x128xf32>
    %27 = math.tanh %26 : vector<16x128xf32>
    %cst_14 = arith.constant 1.000000e+00 : f32
    %28 = vector.broadcast %cst_14 : f32 to vector<16x128xf32>
    %29 = arith.addf %28, %27 : vector<16x128xf32>
    %cst_15 = arith.constant 5.000000e-01 : f32
    %30 = vector.broadcast %cst_15 : f32 to vector<16x128xf32>
    %31 = arith.mulf %30, %29 : vector<16x128xf32>
    %32 = arith.mulf %19, %31 : vector<16x128xf32>
    %33 = arith.truncf %32 : vector<16x128xf32> to vector<16x128xbf16>
    %c0_16 = arith.constant 0 : index
    %c0_17 = arith.constant 0 : index
    %34 = vector.load %arg8[%c0_16, %c0_17] : memref<128x64xbf16, #tpu.memory_space<vmem>>, vector<128x64xbf16>
    %cst_18 = arith.constant dense<0.000000e+00> : vector<16x64xf32>
    %35 = tpu.matmul %33, %34, %cst_18 {dimension_numbers = #tpu.dot_dimension_numbers<[1], [0], [0], [1], [0, 0, 1, 1], [], []>} : vector<16x128xbf16>, vector<128x64xbf16>, vector<16x64xf32> -> vector<16x64xf32>
    %c0_19 = arith.constant 0 : index
    %c0_20 = arith.constant 0 : index
    %36 = vector.load %arg9[%c0_19, %c0_20] : memref<1x64xf32, #tpu.memory_space<vmem>>, vector<1x64xf32>
    %37 = vector.broadcast %36 : vector<1x64xf32> to vector<16x64xf32>
    %38 = arith.addf %35, %37 : vector<16x64xf32>
    %39 = arith.subf %6, %4 : vector<16x64xf32>
    %40 = arith.subf %38, %39 : vector<16x64xf32>
    %41 = arith.mulf %40, %40 : vector<16x64xf32>
    %42 = vector.shape_cast %41 : vector<16x64xf32> to vector<1x16x64xf32>
    %cst_21 = arith.constant dense<0.000000e+00> : vector<1xf32>
    %43 = vector.multi_reduction <add>, %42, %cst_21 [1, 2] : vector<1x16x64xf32> to vector<1xf32>
    %44 = vector.shape_cast %43 : vector<1xf32> to vector<1x1x1xf32>
    %45 = vector.extract %44[0, 0, 0] : f32 from vector<1x1x1xf32>
    %cst_22 = arith.constant 4.8828125E-4 : f32
    %46 = arith.mulf %45, %cst_22 : f32
    %47 = vector.broadcast %46 : f32 to vector<1x8x128xf32>
    %c0_23 = arith.constant 0 : index
    %c0_24 = arith.constant 0 : index
    %c0_25 = arith.constant 0 : index
    %48 = vector.load %arg10[%c0_23, %c0_24, %c0_25] : memref<1x8x128xf32, #tpu.memory_space<vmem>>, vector<1x8x128xf32>
    tpu.vector_store %arg10[%c0_23, %c0_24, %c0_25], %47 {strides = array<i32>} : memref<1x8x128xf32, #tpu.memory_space<vmem>>, vector<1x8x128xf32>,
    return
  }
  func.func @transform_0(%arg0: i32, %arg1: i32, %arg2: memref<2xf32, #tpu.memory_space<smem>>) -> (i32, i32) {
    %c1_i32 = arith.constant 1 : i32
    %0 = arith.muli %arg0, %c1_i32 : i32
    %1 = arith.addi %0, %arg1 : i32
    %c0_i32 = arith.constant 0 : i32
    %c0_i32_0 = arith.constant 0 : i32
    return %1, %c0_i32 : i32, i32
  }
  func.func @transform_1(%arg0: i32, %arg1: i32, %arg2: memref<2xf32, #tpu.memory_space<smem>>) -> (i32, i32) {
    %c1_i32 = arith.constant 1 : i32
    %0 = arith.muli %arg0, %c1_i32 : i32
    %1 = arith.addi %0, %arg1 : i32
    %c0_i32 = arith.constant 0 : i32
    %c0_i32_0 = arith.constant 0 : i32
    return %1, %c0_i32 : i32, i32
  }
  func.func @transform_2(%arg0: i32, %arg1: i32, %arg2: memref<2xf32, #tpu.memory_space<smem>>) -> (i32, i32, i32) {
    %c0_i32 = arith.constant 0 : i32
    %c0_i32_0 = arith.constant 0 : i32
    %c0_i32_1 = arith.constant 0 : i32
    return %arg0, %c0_i32, %c0_i32_0 : i32, i32, i32
  }
  func.func @transform_3(%arg0: i32, %arg1: i32, %arg2: memref<2xf32, #tpu.memory_space<smem>>) -> (i32, i32) {
    %c0_i32 = arith.constant 0 : i32
    %c0_i32_0 = arith.constant 0 : i32
    %c0_i32_1 = arith.constant 0 : i32
    return %c0_i32, %c0_i32_0 : i32, i32
  }
  func.func @transform_4(%arg0: i32, %arg1: i32, %arg2: memref<2xf32, #tpu.memory_space<smem>>) -> (i32, i32) {
    %c0_i32 = arith.constant 0 : i32
    %c0_i32_0 = arith.constant 0 : i32
    %c0_i32_1 = arith.constant 0 : i32
    return %c0_i32, %c0_i32_0 : i32, i32
  }
  func.func @transform_5(%arg0: i32, %arg1: i32, %arg2: memref<2xf32, #tpu.memory_space<smem>>) -> (i32, i32) {
    %c0_i32 = arith.constant 0 : i32
    %c0_i32_0 = arith.constant 0 : i32
    %c0_i32_1 = arith.constant 0 : i32
    return %c0_i32, %c0_i32_0 : i32, i32
  }
  func.func @transform_6(%arg0: i32, %arg1: i32, %arg2: memref<2xf32, #tpu.memory_space<smem>>) -> (i32, i32) {
    %c0_i32 = arith.constant 0 : i32
    %c0_i32_0 = arith.constant 0 : i32
    %c0_i32_1 = arith.constant 0 : i32
    return %c0_i32, %c0_i32_0 : i32, i32
  }
  func.func @transform_7(%arg0: i32, %arg1: i32, %arg2: memref<2xf32, #tpu.memory_space<smem>>) -> (i32, i32, i32) {
    %c1_i32 = arith.constant 1 : i32
    %0 = arith.muli %arg0, %c1_i32 : i32
    %1 = arith.addi %0, %arg1 : i32
    %c0_i32 = arith.constant 0 : i32
    %c0_i32_0 = arith.constant 0 : i32
    %c0_i32_1 = arith.constant 0 : i32
    return %1, %c0_i32, %c0_i32_0 : i32, i32, i32
  }
}

</mosaic_0001>

<llo_original>
// kernel: tpu_custom_call.1
$region0: #{tpu_custom_call.1}
  #allocation0 [shape = 'u32[]', space=smem, size = 0x4, offset = 0x4, fixed_abs, tag = 'smem constant byte address 0x4 - core index']
  #allocation1 [shape = 'u32[144,128]{1,0:T(1,128)}', space=vmem, size = 0x12000, scoped, tag = 'internal scratch']
  #allocation2 [shape = 's32[1]{0}', space=sflag, size = 0x4, scoped, tag = 'scoped memory for tpu_custom_call.1']
  #allocation3 [shape = 'u8[512]{0}', space=smem, size = 0x200, scoped, tag = 'prefetched SMEM operand 0']
  %s0 = inlined_call_operand.vmem [shape: f32[2], index: 0, kind: input, shape index: {}]
  %s1 = inlined_call_operand.vmem [shape: bf16[32,768], index: 1, kind: input, shape index: {}]
  %s2 = inlined_call_operand.vmem [shape: bf16[32,64], index: 2, kind: input, shape index: {}]
  %s3 = inlined_call_operand.vmem [shape: f32[2,1,128], index: 3, kind: input, shape index: {}]
  %s4 = inlined_call_operand.vmem [shape: bf16[768,64], index: 4, kind: input, shape index: {}]
  %s5 = inlined_call_operand.vmem [shape: bf16[64,128], index: 5, kind: input, shape index: {}]
  %s6 = inlined_call_operand.vmem [shape: bf16[128,64], index: 6, kind: input, shape index: {}]
  %s7 = inlined_call_operand.vmem [shape: f32[1,64], index: 7, kind: input, shape index: {}]
  %s8 = inlined_call_operand.hbm [shape: f32[2,8,128], index: 8, kind: output, shape index: {}]
  %s9 = sld [smem:[#allocation0]]
  $region61: #{tpu_custom_call.1} parent=0
    _
  %s11 = ssub.s32 1, %s9
  %s12 = scalar_select 0, %s11, %s9
  %s13 = sshll.u32 %s0, 4
  %s14 = int_to_ptr.vmem [resolvable:$true] %s13
  %16 = dma.vmem_to_smem %s14, 16, [#allocation3], [#allocation2]
  %17 = dma.done [#allocation2], 16
  %18 = sfence
  $region1: #{tpu_custom_call.1} parent=0
    #allocation4 [shape = 'u8[8192]{0}', space=vmem, size = 0x2000, scoped, tag = 'output window, operand 0']
    #allocation5 [shape = 's32[2]{0}', space=sflag, size = 0x8, scoped, tag = 'scoped memory for tpu_custom_call.1']
    %19 = vsyncpa [#allocation5], 0
    %s20 = scalar_lea.sflag [#allocation5], 1
    %21 = vsyncpa %s20, 0
    loop: start=0, step=1, limit=4
    $region2: #{tpu_custom_call.1} parent=1 // loop_pre_header
      _
    $region3: #{tpu_custom_call.1} parent=1 // loop_header
      %s23 = sphi 0, %s27
      %p24 = scmp.ge.s32.totalorder %s23, 4
      %s30 = sphi 0, %s42
      %s31 = sphi 0, %s38
      %s32 = sphi 0, %s30
      %s33 = sphi 0, %s31
      %s34 = sphi 0, %s32
      %s35 = sphi 0, %s33
      %s47 = sphi 0, %s49
      %s50 = sphi 0, %s47
      %s51 = sphi 0, %s50
      %s67 = sphi 0, %s51
      %s75 = sphi 0, %s77
      %s78 = sphi 0, %s75
      %s79 = sphi 0, %s78
      %s95 = sphi 0, %s79
      %s101 = sphi 0, %s103
      %s104 = sphi 0, %s101
      %s105 = sphi 0, %s104
      %s121 = sphi 0, %s105
      %s125 = sphi 0, %s125
      %s127 = sphi 0, %s125
      %s128 = sphi 0, %s127
      %s142 = sphi 0, %s128
      %s146 = sphi 0, %s146
      %s148 = sphi 0, %s146
      %s149 = sphi 0, %s148
      %s163 = sphi 0, %s149
      %s167 = sphi 0, %s167
      %s169 = sphi 0, %s167
      %s170 = sphi 0, %s169
      %s184 = sphi 0, %s170
      %s188 = sphi 0, %s188
      %s190 = sphi 0, %s188
      %s191 = sphi 0, %s190
      %s205 = sphi 0, %s191
      %s213 = sphi 0, %s215
      %s216 = sphi 0, %s213
      %s217 = sphi 0, %s216
      %s233 = sphi 0, %s217
    $region4: #{tpu_custom_call.1} parent=1 // loop_header_branch
      %26 = sbr.rel (%p24) target = $region8
    $region5: #{tpu_custom_call.1} parent=1 // loop_body
      %s28 = ssub.s32 %s23, 1
      %s29 = ssub.s32 %s23, 2
      %s36 = sadd.s32 1, %s31
      %p37 = scmp.ge.s32.totalorder %s36, 1
      %s38 = scalar_select %p37, 0, %s36
      %s39 = sadd.s32 1, %s30
      %s40 = scalar_select %p37, %s39, %s30
      %p41 = scmp.ge.s32.totalorder %s40, 2
      %s42 = scalar_select %p41, 0, %s40
      %s43 = sadd.s32 %s30, %s31
      %s44 = sadd.s32 %s42, %s38
      %s45 = ssub.s32 %s43, %s44
      %p46 = scmp.eq.s32.totalorder %s45, 0
      %s48 = sadd.s32 %s47, 1
      %s49 = scalar_select %p46, %s47, %s48
      %p52 = pneg %p46
      %p53 = scmp.eq.s32.totalorder %s23, 1
      %p54 = por %p52, %p53
      %p55 = scmp.ne.s32.totalorder %s47, %s50
      %p56 = scmp.eq.s32.totalorder %s23, 0
      %p57 = por %p55, %p56
      %p58 = scmp.ne.s32.totalorder %s47, %s50
      %p59 = scmp.eq.s32.totalorder %s28, 1
      %p60 = por %p58, %p59
      %p61 = scmp.ne.s32.totalorder %s50, %s51
      %p62 = scmp.eq.s32.totalorder %s28, 0
      %p63 = por %p61, %p62
      %p64 = scmp.ne.s32.totalorder %s50, %s51
      %p65 = scmp.eq.s32.totalorder %s29, 1
      %p66 = por %p64, %p65
      %p68 = scmp.ne.s32.totalorder %s51, %s67
      %p69 = scmp.eq.s32.totalorder %s29, 0
      %p70 = por %p68, %p69
      %s71 = sadd.s32 %s30, %s31
      %s72 = sadd.s32 %s42, %s38
      %s73 = ssub.s32 %s71, %s72
      %p74 = scmp.eq.s32.totalorder %s73, 0
      %s76 = sadd.s32 %s75, 1
      %s77 = scalar_select %p74, %s75, %s76
      %p80 = pneg %p74
      %p81 = scmp.eq.s32.totalorder %s23, 1
      %p82 = por %p80, %p81
      %p83 = scmp.ne.s32.totalorder %s75, %s78
      %p84 = scmp.eq.s32.totalorder %s23, 0
      %p85 = por %p83, %p84
      %p86 = scmp.ne.s32.totalorder %s75, %s78
      %p87 = scmp.eq.s32.totalorder %s28, 1
      %p88 = por %p86, %p87
      %p89 = scmp.ne.s32.totalorder %s78, %s79
      %p90 = scmp.eq.s32.totalorder %s28, 0
      %p91 = por %p89, %p90
      %p92 = scmp.ne.s32.totalorder %s78, %s79
      %p93 = scmp.eq.s32.totalorder %s29, 1
      %p94 = por %p92, %p93
      %p96 = scmp.ne.s32.totalorder %s79, %s95
      %p97 = scmp.eq.s32.totalorder %s29, 0
      %p98 = por %p96, %p97
      %s99 = ssub.s32 %s30, %s42
      %p100 = scmp.eq.s32.totalorder %s99, 0
      %s102 = sadd.s32 %s101, 1
      %s103 = scalar_select %p100, %s101, %s102
      %p106 = pneg %p100
      %p107 = scmp.eq.s32.totalorder %s23, 1
      %p108 = por %p106, %p107
      %p109 = scmp.ne.s32.totalorder %s101, %s104
      %p110 = scmp.eq.s32.totalorder %s23, 0
      %p111 = por %p109, %p110
      %p112 = scmp.ne.s32.totalorder %s101, %s104
      %p113 = scmp.eq.s32.totalorder %s28, 1
      %p114 = por %p112, %p113
      %p115 = scmp.ne.s32.totalorder %s104, %s105
      %p116 = scmp.eq.s32.totalorder %s28, 0
      %p117 = por %p115, %p116
      %p118 = scmp.ne.s32.totalorder %s104, %s105
      %p119 = scmp.eq.s32.totalorder %s29, 1
      %p120 = por %p118, %p119
      %p122 = scmp.ne.s32.totalorder %s105, %s121
      %p123 = scmp.eq.s32.totalorder %s29, 0
      %p124 = por %p122, %p123
      %s126 = sadd.s32 %s125, 1
      %p129 = scmp.eq.s32.totalorder %s23, 1
      %p130 = scmp.ne.s32.totalorder %s125, %s127
      %p131 = scmp.eq.s32.totalorder %s23, 0
      %p132 = por %p130, %p131
      %p133 = scmp.ne.s32.totalorder %s125, %s127
      %p134 = scmp.eq.s32.totalorder %s28, 1
      %p135 = por %p133, %p134
      %p136 = scmp.ne.s32.totalorder %s127, %s128
      %p137 = scmp.eq.s32.totalorder %s28, 0
      %p138 = por %p136, %p137
      %p139 = scmp.ne.s32.totalorder %s127, %s128
      %p140 = scmp.eq.s32.totalorder %s29, 1
      %p141 = por %p139, %p140
      %p143 = scmp.ne.s32.totalorder %s128, %s142
      %p144 = scmp.eq.s32.totalorder %s29, 0
      %p145 = por %p143, %p144
      %s147 = sadd.s32 %s146, 1
      %p150 = scmp.eq.s32.totalorder %s23, 1
      %p151 = scmp.ne.s32.totalorder %s146, %s148
      %p152 = scmp.eq.s32.totalorder %s23, 0
      %p153 = por %p151, %p152
      %p154 = scmp.ne.s32.totalorder %s146, %s148
      %p155 = scmp.eq.s32.totalorder %s28, 1
      %p156 = por %p154, %p155
      %p157 = scmp.ne.s32.totalorder %s148, %s149
      %p158 = scmp.eq.s32.totalorder %s28, 0
      %p159 = por %p157, %p158
      %p160 = scmp.ne.s32.totalorder %s148, %s149
      %p161 = scmp.eq.s32.totalorder %s29, 1
      %p162 = por %p160, %p161
      %p164 = scmp.ne.s32.totalorder %s149, %s163
      %p165 = scmp.eq.s32.totalorder %s29, 0
      %p166 = por %p164, %p165
      %s168 = sadd.s32 %s167, 1
      %p171 = scmp.eq.s32.totalorder %s23, 1
      %p172 = scmp.ne.s32.totalorder %s167, %s169
      %p173 = scmp.eq.s32.totalorder %s23, 0
      %p174 = por %p172, %p173
      %p175 = scmp.ne.s32.totalorder %s167, %s169
      %p176 = scmp.eq.s32.totalorder %s28, 1
      %p177 = por %p175, %p176
      %p178 = scmp.ne.s32.totalorder %s169, %s170
      %p179 = scmp.eq.s32.totalorder %s28, 0
      %p180 = por %p178, %p179
      %p181 = scmp.ne.s32.totalorder %s169, %s170
      %p182 = scmp.eq.s32.totalorder %s29, 1
      %p183 = por %p181, %p182
      %p185 = scmp.ne.s32.totalorder %s170, %s184
      %p186 = scmp.eq.s32.totalorder %s29, 0
      %p187 = por %p185, %p186
      %s189 = sadd.s32 %s188, 1
      %p192 = scmp.eq.s32.totalorder %s23, 1
      %p193 = scmp.ne.s32.totalorder %s188, %s190
      %p194 = scmp.eq.s32.totalorder %s23, 0
      %p195 = por %p193, %p194
      %p196 = scmp.ne.s32.totalorder %s188, %s190
      %p197 = scmp.eq.s32.totalorder %s28, 1
      %p198 = por %p196, %p197
      %p199 = scmp.ne.s32.totalorder %s190, %s191
      %p200 = scmp.eq.s32.totalorder %s28, 0
      %p201 = por %p199, %p200
      %p202 = scmp.ne.s32.totalorder %s190, %s191
      %p203 = scmp.eq.s32.totalorder %s29, 1
      %p204 = por %p202, %p203
      %p206 = scmp.ne.s32.totalorder %s191, %s205
      %p207 = scmp.eq.s32.totalorder %s29, 0
      %p208 = por %p206, %p207
      %s209 = sadd.s32 %s30, %s31
      %s210 = sadd.s32 %s42, %s38
      %s211 = ssub.s32 %s209, %s210
      %p212 = scmp.eq.s32.totalorder %s211, 0
      %s214 = sadd.s32 %s213, 1
      %s215 = scalar_select %p212, %s213, %s214
      %p218 = pneg %p212
      %p219 = scmp.eq.s32.totalorder %s23, 1
      %p220 = por %p218, %p219
      %p221 = scmp.ne.s32.totalorder %s213, %s216
      %p222 = scmp.eq.s32.totalorder %s23, 0
      %p223 = por %p221, %p222
      %p224 = scmp.ne.s32.totalorder %s213, %s216
      %p225 = scmp.eq.s32.totalorder %s28, 1
      %p226 = por %p224, %p225
      %p227 = scmp.ne.s32.totalorder %s216, %s217
      %p228 = scmp.eq.s32.totalorder %s28, 0
      %p229 = por %p227, %p228
      %p230 = scmp.ne.s32.totalorder %s216, %s217
      %p231 = scmp.eq.s32.totalorder %s29, 1
      %p232 = por %p230, %p231
      %p234 = scmp.ne.s32.totalorder %s217, %s233
      %p235 = scmp.eq.s32.totalorder %s29, 0
      %p236 = por %p234, %p235
      %p237 = scmp.le.s32.totalorder 1, %s23
      %p238 = scmp.lt.s32.totalorder %s23, 3
      %p239 = pnand %p237, %p238
      %p240 = pneg %p239
      // Predicated region
      $region9: #{tpu_custom_call.1} parent=5 // pred_check
        _
      $region10: #{tpu_custom_call.1} parent=5 // pred_check_branch
        %242 = sbr.rel (%p239) target = $region12
      $region11: #{tpu_custom_call.1} parent=5 // pred_region
        %s243 = ssub.s32 %s23, 1
        // Predicated region
        $region13: #{tpu_custom_call.1} parent=11 // pred_check
          %p244 = pneg %p138
        $region14: #{tpu_custom_call.1} parent=11 // pred_check_branch
          %246 = sbr.rel (%p244) target = $region16
        $region15: #{tpu_custom_call.1} parent=11 // pred_region
          _
        $region16: #{tpu_custom_call.1} parent=11 // pred_fallthru
          _
        // Predicated region
        $region17: #{tpu_custom_call.1} parent=11 // pred_check
          %p247 = pneg %p159
        $region18: #{tpu_custom_call.1} parent=11 // pred_check_branch
          %249 = sbr.rel (%p247) target = $region20
        $region19: #{tpu_custom_call.1} parent=11 // pred_region
          _
        $region20: #{tpu_custom_call.1} parent=11 // pred_fallthru
          _
        // Predicated region
        $region21: #{tpu_custom_call.1} parent=11 // pred_check
          %p250 = pneg %p180
        $region22: #{tpu_custom_call.1} parent=11 // pred_check_branch
          %252 = sbr.rel (%p250) target = $region24
        $region23: #{tpu_custom_call.1} parent=11 // pred_region
          _
        $region24: #{tpu_custom_call.1} parent=11 // pred_fallthru
          _
        // Predicated region
        $region25: #{tpu_custom_call.1} parent=11 // pred_check
          %p253 = pneg %p201
        $region26: #{tpu_custom_call.1} parent=11 // pred_check_branch
          %255 = sbr.rel (%p253) target = $region28
        $region27: #{tpu_custom_call.1} parent=11 // pred_region
          _
        $region28: #{tpu_custom_call.1} parent=11 // pred_fallthru
          _
      $region12: #{tpu_custom_call.1} parent=5 // pred_fallthru
        _
      %p256 = scmp.lt.s32.totalorder %s23, 2
      // Predicated region
      $region29: #{tpu_custom_call.1} parent=5 // pred_check
        %p257 = pneg %p256
      $region30: #{tpu_custom_call.1} parent=5 // pred_check_branch
        %259 = sbr.rel (%p257) target = $region32
      $region31: #{tpu_custom_call.1} parent=5 // pred_region
        // Predicated region
        $region33: #{tpu_custom_call.1} parent=31 // pred_check
          %p260 = pneg %p57
        $region34: #{tpu_custom_call.1} parent=31 // pred_check_branch
          %262 = sbr.rel (%p260) target = $region36
        $region35: #{tpu_custom_call.1} parent=31 // pred_region
          %s263 = sadd.s32 %s30, %s31
          %s264 = smul.u32 2, %s263
          %p265 = scmp.lt.s32.totalorder %s264, 3
          %s266 = scalar_select %p265, %s264, 3
          %s267 = smul.addr %s266, 6
          %s268 = smul.addr %s267, 4
          %s269 = scalar_lea.vmem %s1, %s268
          %s270 = sadd.s32 %s30, %s31
          %s271 = smul.u32 2, %s270
        $region36: #{tpu_custom_call.1} parent=31 // pred_fallthru
          _
        // Predicated region
        $region37: #{tpu_custom_call.1} parent=31 // pred_check
          %p272 = pneg %p85
        $region38: #{tpu_custom_call.1} parent=31 // pred_check_branch
          %274 = sbr.rel (%p272) target = $region40
        $region39: #{tpu_custom_call.1} parent=31 // pred_region
          %s275 = sadd.s32 %s30, %s31
          %s276 = smul.u32 2, %s275
          %p277 = scmp.lt.s32.totalorder %s276, 3
          %s278 = scalar_select %p277, %s276, 3
          %s279 = smul.addr %s278, 4
          %s280 = scalar_lea.vmem %s2, %s279
          %s281 = sadd.s32 %s30, %s31
          %s282 = smul.u32 2, %s281
        $region40: #{tpu_custom_call.1} parent=31 // pred_fallthru
          _
        // Predicated region
        $region41: #{tpu_custom_call.1} parent=31 // pred_check
          %p283 = pneg %p111
        $region42: #{tpu_custom_call.1} parent=31 // pred_check_branch
          %285 = sbr.rel (%p283) target = $region44
        $region43: #{tpu_custom_call.1} parent=31 // pred_region
          %p286 = scmp.lt.s32.totalorder %s30, 1
          %s287 = scalar_select %p286, %s30, 1
          %s288 = scalar_lea.vmem %s3, %s287
        $region44: #{tpu_custom_call.1} parent=31 // pred_fallthru
          _
      $region32: #{tpu_custom_call.1} parent=5 // pred_fallthru
        _
      %p289 = scmp.le.s32.totalorder 1, %s23
      %p290 = scmp.lt.s32.totalorder %s23, 3
      %p291 = pnand %p289, %p290
      %p292 = pneg %p291
      // Predicated region
      $region45: #{tpu_custom_call.1} parent=5 // pred_check
        _
      $region46: #{tpu_custom_call.1} parent=5 // pred_check_branch
        %294 = sbr.rel (%p291) target = $region48
      $region47: #{tpu_custom_call.1} parent=5 // pred_region
        %s295 = ssub.s32 %s23, 1
        %s296 = sadd.s32 %s32, %s33
        %s297 = smul.u32 2, %s296
        %p298 = scmp.lt.s32.totalorder %s297, 3
        %s299 = scalar_select %p298, %s297, 3
        %s300 = smul.addr %s299, 6
        %s301 = smul.addr %s300, 4
        %s302 = scalar_lea.vmem %s1, %s301
        %p303 = pneg %p63
        %p304 = pneg %p60
        %s305 = sadd.s32 %s32, %s33
        %s306 = smul.u32 2, %s305
        %p307 = scmp.lt.s32.totalorder %s306, 3
        %s308 = scalar_select %p307, %s306, 3
        %s309 = smul.addr %s308, 4
        %s310 = scalar_lea.vmem %s2, %s309
        %p311 = pneg %p91
        %p312 = pneg %p88
        %p313 = scmp.lt.s32.totalorder %s32, 1
        %s314 = scalar_select %p313, %s32, 1
        %s315 = scalar_lea.vmem %s3, %s314
        %p316 = pneg %p117
        %p317 = pneg %p114
        %p318 = pneg %p138
        %p319 = pneg %p135
        %p320 = pneg %p159
        %p321 = pneg %p156
        %p322 = pneg %p180
        %p323 = pneg %p177
        %p324 = pneg %p201
        %p325 = pneg %p198
        %p326 = pneg %p229
        %p327 = pneg %p226
        %s328 = sand.u32 %s216, 1
        %s329 = scalar_lea.sflag [#allocation5], %s328
        %s330 = sand.u32 %s216, 1
        %s331 = smul.addr %s330, 8
        %s332 = scalar_lea.vmem [#allocation4], %s331
        %s333 = sadd.s32 %s32, %s33
        %s334 = smul.u32 2, %s333
        %p335 = scmp.lt.s32.totalorder %s334, 3
        %s336 = scalar_select %p335, %s334, 3
        %s337 = smul.addr %s336, 6
        %s338 = smul.addr %s337, 4
        %s339 = scalar_lea.vmem %s1, %s338
        %s340 = sadd.s32 %s32, %s33
        %s341 = smul.u32 2, %s340
        %s342 = sadd.s32 %s32, %s33
        %s343 = smul.u32 2, %s342
        %p344 = scmp.lt.s32.totalorder %s343, 3
        %s345 = scalar_select %p344, %s343, 3
        %s346 = smul.addr %s345, 4
        %s347 = scalar_lea.vmem %s2, %s346
        %s348 = sadd.s32 %s32, %s33
        %s349 = smul.u32 2, %s348
        %p350 = scmp.lt.s32.totalorder %s32, 1
        %s351 = scalar_select %p350, %s32, 1
        %s352 = scalar_lea.vmem %s3, %s351
        %s353 = sadd.s32 %s32, %s33
        %s355 = sld [smem:[#allocation3 + %s32]]
        %v356 = vld [vmem:[%s339] sm:$0xff]
        %v357 = vld [vmem:[%s339 + $0x8] sm:$0xff]
        %v358 = vld [vmem:[%s339 + $0x10] sm:$0xff]
        %v359 = vld [vmem:[%s339 + $0x18] sm:$0xff]
        %v360 = vld [vmem:[%s339 + $0x20] sm:$0xff]
        %v361 = vld [vmem:[%s339 + $0x28] sm:$0xff]
        %v362 = vld [vmem:[%s4] sm:$0xf]
        %v363 = vld [vmem:[%s4 + $0x4] sm:$0xf]
        %v364 = vld [vmem:[%s4 + $0x8] sm:$0xf]
        %v365 = vld [vmem:[%s4 + $0xc] sm:$0xf]
        %v366 = vld [vmem:[%s4 + $0x10] sm:$0xf]
        %v367 = vld [vmem:[%s4 + $0x14] sm:$0xf]
        %v368 = vld [vmem:[%s4 + $0x18] sm:$0xf]
        %v369 = vld [vmem:[%s4 + $0x1c] sm:$0xf]
        %v370 = vld [vmem:[%s4 + $0x20] sm:$0xf]
        %v371 = vld [vmem:[%s4 + $0x24] sm:$0xf]
        %v372 = vld [vmem:[%s4 + $0x28] sm:$0xf]
        %v373 = vld [vmem:[%s4 + $0x2c] sm:$0xf]
        %v374 = vld [vmem:[%s4 + $0x30] sm:$0xf]
        %v375 = vld [vmem:[%s4 + $0x34] sm:$0xf]
        %v376 = vld [vmem:[%s4 + $0x38] sm:$0xf]
        %v377 = vld [vmem:[%s4 + $0x3c] sm:$0xf]
        %v378 = vld [vmem:[%s4 + $0x40] sm:$0xf]
        %v379 = vld [vmem:[%s4 + $0x44] sm:$0xf]
        %v380 = vld [vmem:[%s4 + $0x48] sm:$0xf]
        %v381 = vld [vmem:[%s4 + $0x4c] sm:$0xf]
        %v382 = vld [vmem:[%s4 + $0x50] sm:$0xf]
        %v383 = vld [vmem:[%s4 + $0x54] sm:$0xf]
        %v384 = vld [vmem:[%s4 + $0x58] sm:$0xf]
        %v385 = vld [vmem:[%s4 + $0x5c] sm:$0xf]
        %v386 = vld [vmem:[%s4 + $0x60] sm:$0xf]
        %v387 = vld [vmem:[%s4 + $0x64] sm:$0xf]
        %v388 = vld [vmem:[%s4 + $0x68] sm:$0xf]
        %v389 = vld [vmem:[%s4 + $0x6c] sm:$0xf]
        %v390 = vld [vmem:[%s4 + $0x70] sm:$0xf]
        %v391 = vld [vmem:[%s4 + $0x74] sm:$0xf]
        %v392 = vld [vmem:[%s4 + $0x78] sm:$0xf]
        %v393 = vld [vmem:[%s4 + $0x7c] sm:$0xf]
        %v394 = vld [vmem:[%s4 + $0x80] sm:$0xf]
        %v395 = vld [vmem:[%s4 + $0x84] sm:$0xf]
        %v396 = vld [vmem:[%s4 + $0x88] sm:$0xf]
        %v397 = vld [vmem:[%s4 + $0x8c] sm:$0xf]
        %v398 = vld [vmem:[%s4 + $0x90] sm:$0xf]
        %v399 = vld [vmem:[%s4 + $0x94] sm:$0xf]
        %v400 = vld [vmem:[%s4 + $0x98] sm:$0xf]
        %v401 = vld [vmem:[%s4 + $0x9c] sm:$0xf]
        %v402 = vld [vmem:[%s4 + $0xa0] sm:$0xf]
        %v403 = vld [vmem:[%s4 + $0xa4] sm:$0xf]
        %v404 = vld [vmem:[%s4 + $0xa8] sm:$0xf]
        %v405 = vld [vmem:[%s4 + $0xac] sm:$0xf]
        %v406 = vld [vmem:[%s4 + $0xb0] sm:$0xf]
        %v407 = vld [vmem:[%s4 + $0xb4] sm:$0xf]
        %v408 = vld [vmem:[%s4 + $0xb8] sm:$0xf]
        %v409 = vld [vmem:[%s4 + $0xbc] sm:$0xf]
        %v410 = vld [vmem:[%s4 + $0xc0] sm:$0xf]
        %v411 = vld [vmem:[%s4 + $0xc4] sm:$0xf]
        %v412 = vld [vmem:[%s4 + $0xc8] sm:$0xf]
        %v413 = vld [vmem:[%s4 + $0xcc] sm:$0xf]
        %v414 = vld [vmem:[%s4 + $0xd0] sm:$0xf]
        %v415 = vld [vmem:[%s4 + $0xd4] sm:$0xf]
        %v416 = vld [vmem:[%s4 + $0xd8] sm:$0xf]
        %v417 = vld [vmem:[%s4 + $0xdc] sm:$0xf]
        %v418 = vld [vmem:[%s4 + $0xe0] sm:$0xf]
        %v419 = vld [vmem:[%s4 + $0xe4] sm:$0xf]
        %v420 = vld [vmem:[%s4 + $0xe8] sm:$0xf]
        %v421 = vld [vmem:[%s4 + $0xec] sm:$0xf]
        %v422 = vld [vmem:[%s4 + $0xf0] sm:$0xf]
        %v423 = vld [vmem:[%s4 + $0xf4] sm:$0xf]
        %v424 = vld [vmem:[%s4 + $0xf8] sm:$0xf]
        %v425 = vld [vmem:[%s4 + $0xfc] sm:$0xf]
        %v426 = vld [vmem:[%s4 + $0x100] sm:$0xf]
        %v427 = vld [vmem:[%s4 + $0x104] sm:$0xf]
        %v428 = vld [vmem:[%s4 + $0x108] sm:$0xf]
        %v429 = vld [vmem:[%s4 + $0x10c] sm:$0xf]
        %v430 = vld [vmem:[%s4 + $0x110] sm:$0xf]
        %v431 = vld [vmem:[%s4 + $0x114] sm:$0xf]
        %v432 = vld [vmem:[%s4 + $0x118] sm:$0xf]
        %v433 = vld [vmem:[%s4 + $0x11c] sm:$0xf]
        %v434 = vld [vmem:[%s4 + $0x120] sm:$0xf]
        %v435 = vld [vmem:[%s4 + $0x124] sm:$0xf]
        %v436 = vld [vmem:[%s4 + $0x128] sm:$0xf]
        %v437 = vld [vmem:[%s4 + $0x12c] sm:$0xf]
        %v438 = vld [vmem:[%s4 + $0x130] sm:$0xf]
        %v439 = vld [vmem:[%s4 + $0x134] sm:$0xf]
        %v440 = vld [vmem:[%s4 + $0x138] sm:$0xf]
        %v441 = vld [vmem:[%s4 + $0x13c] sm:$0xf]
        %v442 = vld [vmem:[%s4 + $0x140] sm:$0xf]
        %v443 = vld [vmem:[%s4 + $0x144] sm:$0xf]
        %v444 = vld [vmem:[%s4 + $0x148] sm:$0xf]
        %v445 = vld [vmem:[%s4 + $0x14c] sm:$0xf]
        %v446 = vld [vmem:[%s4 + $0x150] sm:$0xf]
        %v447 = vld [vmem:[%s4 + $0x154] sm:$0xf]
        %v448 = vld [vmem:[%s4 + $0x158] sm:$0xf]
        %v449 = vld [vmem:[%s4 + $0x15c] sm:$0xf]
        %v450 = vld [vmem:[%s4 + $0x160] sm:$0xf]
        %v451 = vld [vmem:[%s4 + $0x164] sm:$0xf]
        %v452 = vld [vmem:[%s4 + $0x168] sm:$0xf]
        %v453 = vld [vmem:[%s4 + $0x16c] sm:$0xf]
        %v454 = vld [vmem:[%s4 + $0x170] sm:$0xf]
        %v455 = vld [vmem:[%s4 + $0x174] sm:$0xf]
        %v456 = vld [vmem:[%s4 + $0x178] sm:$0xf]
        %v457 = vld [vmem:[%s4 + $0x17c] sm:$0xf]
        %v464 = vunpack.c.l.b16 %v356
        %v465 = vunpack.c.h.b16 %v356
        %v466 = vunpack.c.l.b16 %v357
        %v467 = vunpack.c.h.b16 %v357
        %v468 = vunpack.c.l.b16 %v358
        %v469 = vunpack.c.h.b16 %v358
        %v470 = vunpack.c.l.b16 %v359
        %v471 = vunpack.c.h.b16 %v359
        %v472 = vunpack.c.l.b16 %v360
        %v473 = vunpack.c.h.b16 %v360
        %v474 = vunpack.c.l.b16 %v361
        %v475 = vunpack.c.h.b16 %v361
        %v476 = vpack.c.b16 %v470, %v464
        %v477 = vpack.c.b16 %v471, %v465
        %v478 = vpack.c.b16 %v472, %v466
        %v479 = vpack.c.b16 %v473, %v467
        %v480 = vpack.c.b16 %v474, %v468
        %v481 = vpack.c.b16 %v475, %v469
        %v584 = vunpack.c.l.b16 %v362
        %v585 = vunpack.c.l.b16 %v363
        %v586 = vunpack.c.l.b16 %v364
        %v587 = vunpack.c.l.b16 %v365
        %v588 = vunpack.c.l.b16 %v366
        %v589 = vunpack.c.l.b16 %v367
        %v590 = vunpack.c.l.b16 %v368
        %v591 = vunpack.c.l.b16 %v369
        %v592 = vunpack.c.l.b16 %v370
        %v593 = vunpack.c.l.b16 %v371
        %v594 = vunpack.c.l.b16 %v372
        %v595 = vunpack.c.l.b16 %v373
        %v596 = vunpack.c.l.b16 %v374
        %v597 = vunpack.c.l.b16 %v375
        %v598 = vunpack.c.l.b16 %v376
        %v599 = vunpack.c.l.b16 %v377
        %v600 = vunpack.c.l.b16 %v378
        %v601 = vunpack.c.l.b16 %v379
        %v602 = vunpack.c.l.b16 %v380
        %v603 = vunpack.c.l.b16 %v381
        %v604 = vunpack.c.l.b16 %v382
        %v605 = vunpack.c.l.b16 %v383
        %v606 = vunpack.c.l.b16 %v384
        %v607 = vunpack.c.l.b16 %v385
        %v608 = vunpack.c.l.b16 %v386
        %v609 = vunpack.c.l.b16 %v387
        %v610 = vunpack.c.l.b16 %v388
        %v611 = vunpack.c.l.b16 %v389
        %v612 = vunpack.c.l.b16 %v390
        %v613 = vunpack.c.l.b16 %v391
        %v614 = vunpack.c.l.b16 %v392
        %v615 = vunpack.c.l.b16 %v393
        %v616 = vunpack.c.l.b16 %v394
        %v617 = vunpack.c.l.b16 %v395
        %v618 = vunpack.c.l.b16 %v396
        %v619 = vunpack.c.l.b16 %v397
        %v620 = vunpack.c.l.b16 %v398
        %v621 = vunpack.c.l.b16 %v399
        %v622 = vunpack.c.l.b16 %v400
        %v623 = vunpack.c.l.b16 %v401
        %v624 = vunpack.c.l.b16 %v402
        %v625 = vunpack.c.l.b16 %v403
        %v626 = vunpack.c.l.b16 %v404
        %v627 = vunpack.c.l.b16 %v405
        %v628 = vunpack.c.l.b16 %v406
        %v629 = vunpack.c.l.b16 %v407
        %v630 = vunpack.c.l.b16 %v408
        %v631 = vunpack.c.l.b16 %v409
        %v632 = vunpack.c.l.b16 %v410
        %v633 = vunpack.c.l.b16 %v411
        %v634 = vunpack.c.l.b16 %v412
        %v635 = vunpack.c.l.b16 %v413
        %v636 = vunpack.c.l.b16 %v414
        %v637 = vunpack.c.l.b16 %v415
        %v638 = vunpack.c.l.b16 %v416
        %v639 = vunpack.c.l.b16 %v417
        %v640 = vunpack.c.l.b16 %v418
        %v641 = vunpack.c.l.b16 %v419
        %v642 = vunpack.c.l.b16 %v420
        %v643 = vunpack.c.l.b16 %v421
        %v644 = vunpack.c.l.b16 %v422
        %v645 = vunpack.c.l.b16 %v423
        %v646 = vunpack.c.l.b16 %v424
        %v647 = vunpack.c.l.b16 %v425
        %v648 = vunpack.c.l.b16 %v426
        %v649 = vunpack.c.l.b16 %v427
        %v650 = vunpack.c.l.b16 %v428
        %v651 = vunpack.c.l.b16 %v429
        %v652 = vunpack.c.l.b16 %v430
        %v653 = vunpack.c.l.b16 %v431
        %v654 = vunpack.c.l.b16 %v432
        %v655 = vunpack.c.l.b16 %v433
        %v656 = vunpack.c.l.b16 %v434
        %v657 = vunpack.c.l.b16 %v435
        %v658 = vunpack.c.l.b16 %v436
        %v659 = vunpack.c.l.b16 %v437
        %v660 = vunpack.c.l.b16 %v438
        %v661 = vunpack.c.l.b16 %v439
        %v662 = vunpack.c.l.b16 %v440
        %v663 = vunpack.c.l.b16 %v441
        %v664 = vunpack.c.l.b16 %v442
        %v665 = vunpack.c.l.b16 %v443
        %v666 = vunpack.c.l.b16 %v444
        %v667 = vunpack.c.l.b16 %v445
        %v668 = vunpack.c.l.b16 %v446
        %v669 = vunpack.c.l.b16 %v447
        %v670 = vunpack.c.l.b16 %v448
        %v671 = vunpack.c.l.b16 %v449
        %v672 = vunpack.c.l.b16 %v450
        %v673 = vunpack.c.l.b16 %v451
        %v674 = vunpack.c.l.b16 %v452
        %v675 = vunpack.c.l.b16 %v453
        %v676 = vunpack.c.l.b16 %v454
        %v677 = vunpack.c.l.b16 %v455
        %v678 = vunpack.c.l.b16 %v456
        %v679 = vunpack.c.l.b16 %v457
        %v680 = vpack.c.b16 %v585, %v584
        %v681 = vpack.c.b16 %v587, %v586
        %v682 = vpack.c.b16 %v589, %v588
        %v683 = vpack.c.b16 %v591, %v590
        %v684 = vpack.c.b16 %v593, %v592
        %v685 = vpack.c.b16 %v595, %v594
        %v686 = vpack.c.b16 %v597, %v596
        %v687 = vpack.c.b16 %v599, %v598
        %v688 = vpack.c.b16 %v601, %v600
        %v689 = vpack.c.b16 %v603, %v602
        %v690 = vpack.c.b16 %v605, %v604
        %v691 = vpack.c.b16 %v607, %v606
        %v692 = vpack.c.b16 %v609, %v608
        %v693 = vpack.c.b16 %v611, %v610
        %v694 = vpack.c.b16 %v613, %v612
        %v695 = vpack.c.b16 %v615, %v614
        %v696 = vpack.c.b16 %v617, %v616
        %v697 = vpack.c.b16 %v619, %v618
        %v698 = vpack.c.b16 %v621, %v620
        %v699 = vpack.c.b16 %v623, %v622
        %v700 = vpack.c.b16 %v625, %v624
        %v701 = vpack.c.b16 %v627, %v626
        %v702 = vpack.c.b16 %v629, %v628
        %v703 = vpack.c.b16 %v631, %v630
        %v704 = vpack.c.b16 %v633, %v632
        %v705 = vpack.c.b16 %v635, %v634
        %v706 = vpack.c.b16 %v637, %v636
        %v707 = vpack.c.b16 %v639, %v638
        %v708 = vpack.c.b16 %v641, %v640
        %v709 = vpack.c.b16 %v643, %v642
        %v710 = vpack.c.b16 %v645, %v644
        %v711 = vpack.c.b16 %v647, %v646
        %v712 = vpack.c.b16 %v649, %v648
        %v713 = vpack.c.b16 %v651, %v650
        %v714 = vpack.c.b16 %v653, %v652
        %v715 = vpack.c.b16 %v655, %v654
        %v716 = vpack.c.b16 %v657, %v656
        %v717 = vpack.c.b16 %v659, %v658
        %v718 = vpack.c.b16 %v661, %v660
        %v719 = vpack.c.b16 %v663, %v662
        %v720 = vpack.c.b16 %v665, %v664
        %v721 = vpack.c.b16 %v667, %v666
        %v722 = vpack.c.b16 %v669, %v668
        %v723 = vpack.c.b16 %v671, %v670
        %v724 = vpack.c.b16 %v673, %v672
        %v725 = vpack.c.b16 %v675, %v674
        %v726 = vpack.c.b16 %v677, %v676
        %v727 = vpack.c.b16 %v679, %v678
        %776 = vmatprep.subr.bf16.mxu0 0
        %777 = vmatpush1.bf16.msra.mxu0 %v680
        %778 = vmatprep.subr.bf16.mxu0 0
        %779 = vmatpush1.bf16.msra.mxu0 %v681
        %780 = vmatprep.subr.bf16.mxu0 0
        %781 = vmatpush1.bf16.msra.mxu0 %v682
        %782 = vmatprep.subr.bf16.mxu0 0
        %783 = vmatpush1.bf16.msra.mxu0 %v683
        %784 = vmatprep.subr.bf16.mxu0 0
        %785 = vmatpush1.bf16.msra.mxu0 %v684
        %786 = vmatprep.subr.bf16.mxu0 0
        %787 = vmatpush1.bf16.msra.mxu0 %v685
        %788 = vmatprep.subr.bf16.mxu0 0
        %789 = vmatpush1.bf16.msra.mxu0 %v686
        %790 = vmatprep.subr.bf16.mxu0 0
        %791 = vmatpush1.bf16.msra.mxu0 %v687
        %792 = vmatprep.subr.bf16.mxu0 0
        %793 = vmatpush1.bf16.msra.mxu0 %v688
        %794 = vmatprep.subr.bf16.mxu0 0
        %795 = vmatpush1.bf16.msra.mxu0 %v689
        %796 = vmatprep.subr.bf16.mxu0 0
        %797 = vmatpush1.bf16.msra.mxu0 %v690
        %798 = vmatprep.subr.bf16.mxu0 0
        %799 = vmatpush1.bf16.msra.mxu0 %v691
        %800 = vmatprep.subr.bf16.mxu0 0
        %801 = vmatpush1.bf16.msra.mxu0 %v692
        %802 = vmatprep.subr.bf16.mxu0 0
        %803 = vmatpush1.bf16.msra.mxu0 %v693
        %804 = vmatprep.subr.bf16.mxu0 0
        %805 = vmatpush1.bf16.msra.mxu0 %v694
        %806 = vmatprep.subr.bf16.mxu0 0
        %807 = vmatpush1.bf16.msra.mxu0 %v695
        %808 = vmatprep.mubr.bf16.mxu0 %v477
        %809 = vmatmul.mubr.bf16.gmra.mrb[0].mxu0 %v476
        %v810 = vpop.f32.mrb[0].mxu0
        %v811 = vadd.f32 0.0, %v810
        %v812 = vpop.f32.mrb[0].mxu0
        %v813 = vpop.f32.mrb[0].mxu0
        %v814 = vadd.f32 0.0, %v813
        %v815 = vpop.f32.mrb[0].mxu0
        %816 = vdwg.mxu0
        %817 = vmatprep.subr.bf16.mxu0 0
        %818 = vmatpush1.bf16.msra.mxu0 %v696
        %819 = vmatprep.subr.bf16.mxu0 0
        %820 = vmatpush1.bf16.msra.mxu0 %v697
        %821 = vmatprep.subr.bf16.mxu0 0
        %822 = vmatpush1.bf16.msra.mxu0 %v698
        %823 = vmatprep.subr.bf16.mxu0 0
        %824 = vmatpush1.bf16.msra.mxu0 %v699
        %825 = vmatprep.subr.bf16.mxu0 0
        %826 = vmatpush1.bf16.msra.mxu0 %v700
        %827 = vmatprep.subr.bf16.mxu0 0
        %828 = vmatpush1.bf16.msra.mxu0 %v701
        %829 = vmatprep.subr.bf16.mxu0 0
        %830 = vmatpush1.bf16.msra.mxu0 %v702
        %831 = vmatprep.subr.bf16.mxu0 0
        %832 = vmatpush1.bf16.msra.mxu0 %v703
        %833 = vmatprep.subr.bf16.mxu0 0
        %834 = vmatpush1.bf16.msra.mxu0 %v704
        %835 = vmatprep.subr.bf16.mxu0 0
        %836 = vmatpush1.bf16.msra.mxu0 %v705
        %837 = vmatprep.subr.bf16.mxu0 0
        %838 = vmatpush1.bf16.msra.mxu0 %v706
        %839 = vmatprep.subr.bf16.mxu0 0
        %840 = vmatpush1.bf16.msra.mxu0 %v707
        %841 = vmatprep.subr.bf16.mxu0 0
        %842 = vmatpush1.bf16.msra.mxu0 %v708
        %843 = vmatprep.subr.bf16.mxu0 0
        %844 = vmatpush1.bf16.msra.mxu0 %v709
        %845 = vmatprep.subr.bf16.mxu0 0
        %846 = vmatpush1.bf16.msra.mxu0 %v710
        %847 = vmatprep.subr.bf16.mxu0 0
        %848 = vmatpush1.bf16.msra.mxu0 %v711
        %849 = vmatprep.mubr.bf16.mxu0 %v479
        %850 = vmatmul.mubr.bf16.gmra.mrb[0].mxu0 %v478
        %v851 = vpop.f32.mrb[0].mxu0
        %v852 = vadd.f32 %v811, %v851
        %v853 = vpop.f32.mrb[0].mxu0
        %v854 = vpop.f32.mrb[0].mxu0
        %v855 = vadd.f32 %v814, %v854
        %v856 = vpop.f32.mrb[0].mxu0
        %857 = vdwg.mxu0
        %858 = vmatprep.subr.bf16.mxu0 0
        %859 = vmatpush1.bf16.msra.mxu0 %v712
        %860 = vmatprep.subr.bf16.mxu0 0
        %861 = vmatpush1.bf16.msra.mxu0 %v713
        %862 = vmatprep.subr.bf16.mxu0 0
        %863 = vmatpush1.bf16.msra.mxu0 %v714
        %864 = vmatprep.subr.bf16.mxu0 0
        %865 = vmatpush1.bf16.msra.mxu0 %v715
        %866 = vmatprep.subr.bf16.mxu0 0
        %867 = vmatpush1.bf16.msra.mxu0 %v716
        %868 = vmatprep.subr.bf16.mxu0 0
        %869 = vmatpush1.bf16.msra.mxu0 %v717
        %870 = vmatprep.subr.bf16.mxu0 0
        %871 = vmatpush1.bf16.msra.mxu0 %v718
        %872 = vmatprep.subr.bf16.mxu0 0
        %873 = vmatpush1.bf16.msra.mxu0 %v719
        %874 = vmatprep.subr.bf16.mxu0 0
        %875 = vmatpush1.bf16.msra.mxu0 %v720
        %876 = vmatprep.subr.bf16.mxu0 0
        %877 = vmatpush1.bf16.msra.mxu0 %v721
        %878 = vmatprep.subr.bf16.mxu0 0
        %879 = vmatpush1.bf16.msra.mxu0 %v722
        %880 = vmatprep.subr.bf16.mxu0 0
        %881 = vmatpush1.bf16.msra.mxu0 %v723
        %882 = vmatprep.subr.bf16.mxu0 0
        %883 = vmatpush1.bf16.msra.mxu0 %v724
        %884 = vmatprep.subr.bf16.mxu0 0
        %885 = vmatpush1.bf16.msra.mxu0 %v725
        %886 = vmatprep.subr.bf16.mxu0 0
        %887 = vmatpush1.bf16.msra.mxu0 %v726
        %888 = vmatprep.subr.bf16.mxu0 0
        %889 = vmatpush1.bf16.msra.mxu0 %v727
        %890 = vmatprep.mubr.bf16.mxu0 %v481
        %891 = vmatmul.mubr.bf16.gmra.mrb[0].mxu0 %v480
        %v892 = vpop.f32.mrb[0].mxu0
        %v893 = vadd.f32 %v852, %v892
        %v894 = vpop.f32.mrb[0].mxu0
        %v895 = vpop.f32.mrb[0].mxu0
        %v896 = vadd.f32 %v855, %v895
        %v897 = vpop.f32.mrb[0].mxu0
        %898 = vdwg.mxu0
        %v899 = vld [vmem:[%s347] sm:$0xf]
        %v900 = vld [vmem:[%s347 + $0x4] sm:$0xf]
        %v901 = vunpack.c.l.bf16 %v899
        %v902 = vunpack.c.l.bf16 %v900
        %s903 = ssub.f32 1.0, %s355
        %v904 = vstv %s903
        %v905 = vmul.f32 %v904, %v893
        %v906 = vmul.f32 %v904, %v896
        %v907 = vstv %s355
        %v908 = vmul.f32 %v907, %v901
        %v909 = vmul.f32 %v907, %v902
        %v910 = vadd.f32 %v905, %v908
        %v911 = vadd.f32 %v906, %v909
        %v912 = vpack.c.bf16 %v911, %v910
        %v913 = vld [vmem:[%s5] sm:$0xf]
        %v914 = vld [vmem:[%s5 + $0x4] sm:$0xf]
        %v915 = vld [vmem:[%s5 + $0x8] sm:$0xf]
        %v916 = vld [vmem:[%s5 + $0xc] sm:$0xf]
        %v917 = vld [vmem:[%s5 + $0x10] sm:$0xf]
        %v918 = vld [vmem:[%s5 + $0x14] sm:$0xf]
        %v919 = vld [vmem:[%s5 + $0x18] sm:$0xf]
        %v920 = vld [vmem:[%s5 + $0x1c] sm:$0xf]
        %v921 = vld [vmem:[%s352] sm:$0x1]
        %v923 = vlaneseq
        %v924 = vshrl.u32 %v923, 7
        %v925 = vsub.s32 0, %v924
        %v926 = vrot.slane %v921, %v925
        %v936 = vunpack.c.l.b16 %v913
        %v937 = vunpack.c.l.b16 %v914
        %v938 = vunpack.c.l.b16 %v915
        %v939 = vunpack.c.l.b16 %v916
        %v940 = vunpack.c.l.b16 %v917
        %v941 = vunpack.c.l.b16 %v918
        %v942 = vunpack.c.l.b16 %v919
        %v943 = vunpack.c.l.b16 %v920
        %v944 = vpack.c.b16 %v937, %v936
        %v945 = vpack.c.b16 %v939, %v938
        %v946 = vpack.c.b16 %v941, %v940
        %v947 = vpack.c.b16 %v943, %v942
        %vm952 = vcmask 523264
        %v954 = vsel %vm952, %v912, 0
        %956 = vmatprep.subr.bf16.mxu0 0
        %957 = vmatpush1.bf16.msra.mxu0 %v944
        %958 = vmatprep.subr.bf16.mxu0 0
        %959 = vmatpush1.bf16.msra.mxu0 %v945
        %960 = vmatprep.subr.bf16.mxu0 0
        %961 = vmatpush1.bf16.msra.mxu0 %v946
        %962 = vmatprep.subr.bf16.mxu0 0
        %963 = vmatpush1.bf16.msra.mxu0 %v947
        %964 = vmatprep.subr.bf16.mxu0 0
        %965 = vmatpush1.bf16.msra.mxu0 0
        %966 = vmatprep.subr.bf16.mxu0 0
        %967 = vmatpush1.bf16.msra.mxu0 0
        %968 = vmatprep.subr.bf16.mxu0 0
        %969 = vmatpush1.bf16.msra.mxu0 0
        %970 = vmatprep.subr.bf16.mxu0 0
        %971 = vmatpush1.bf16.msra.mxu0 0
        %972 = vmatprep.subr.bf16.mxu0 0
        %973 = vmatpush1.bf16.msra.mxu0 0
        %974 = vmatprep.subr.bf16.mxu0 0
        %975 = vmatpush1.bf16.msra.mxu0 0
        %976 = vmatprep.subr.bf16.mxu0 0
        %977 = vmatpush1.bf16.msra.mxu0 0
        %978 = vmatprep.subr.bf16.mxu0 0
        %979 = vmatpush1.bf16.msra.mxu0 0
        %980 = vmatprep.subr.bf16.mxu0 0
        %981 = vmatpush1.bf16.msra.mxu0 0
        %982 = vmatprep.subr.bf16.mxu0 0
        %983 = vmatpush1.bf16.msra.mxu0 0
        %984 = vmatprep.subr.bf16.mxu0 0
        %985 = vmatpush1.bf16.msra.mxu0 0
        %986 = vmatprep.subr.bf16.mxu0 0
        %987 = vmatpush1.bf16.msra.mxu0 0
        %988 = vmatprep.mubr.bf16.mxu0 0
        %989 = vmatmul.mubr.bf16.gmra.mrb[0].mxu0 %v954
        %v990 = vpop.f32.mrb[0].mxu0
        %v991 = vadd.f32 %v926, %v990
        %v992 = vpop.f32.mrb[0].mxu0
        %v993 = vpop.f32.mrb[0].mxu0
        %v994 = vadd.f32 %v926, %v993
        %v995 = vpop.f32.mrb[0].mxu0
        %996 = vdwg.mxu0
        %v997 = vmul.f32 %v991, %v991
        %v998 = vmul.f32 %v994, %v994
        %v999 = vmul.f32 %v991, %v997
        %v1000 = vmul.f32 %v994, %v998
        %v1001 = vmul.f32 %v999, 0.044715
        %v1002 = vmul.f32 %v1000, 0.044715
        %v1003 = vadd.f32 %v991, %v1001
        %v1004 = vadd.f32 %v994, %v1002
        %v1005 = vmul.f32 %v1003, 0.7978846
        %v1006 = vmul.f32 %v1004, 0.7978846
        %v1007 = vtanh.pop %v1005
        %v1008 = vtanh.pop %v1006
        %v1009 = vadd.f32 %v1007, 1.0
        %v1010 = vadd.f32 %v1008, 1.0
        %v1011 = vmul.f32 %v1009, 0.5
        %v1012 = vmul.f32 %v1010, 0.5
        %v1013 = vmul.f32 %v991, %v1011
        %v1014 = vmul.f32 %v994, %v1012
        %v1015 = vpack.c.bf16 %v1014, %v1013
        %v1016 = vld [vmem:[%s6] sm:$0xf]
        %v1017 = vld [vmem:[%s6 + $0x4] sm:$0xf]
        %v1018 = vld [vmem:[%s6 + $0x8] sm:$0xf]
        %v1019 = vld [vmem:[%s6 + $0xc] sm:$0xf]
        %v1020 = vld [vmem:[%s6 + $0x10] sm:$0xf]
        %v1021 = vld [vmem:[%s6 + $0x14] sm:$0xf]
        %v1022 = vld [vmem:[%s6 + $0x18] sm:$0xf]
        %v1023 = vld [vmem:[%s6 + $0x1c] sm:$0xf]
        %v1024 = vld [vmem:[%s6 + $0x20] sm:$0xf]
        %v1025 = vld [vmem:[%s6 + $0x24] sm:$0xf]
        %v1026 = vld [vmem:[%s6 + $0x28] sm:$0xf]
        %v1027 = vld [vmem:[%s6 + $0x2c] sm:$0xf]
        %v1028 = vld [vmem:[%s6 + $0x30] sm:$0xf]
        %v1029 = vld [vmem:[%s6 + $0x34] sm:$0xf]
        %v1030 = vld [vmem:[%s6 + $0x38] sm:$0xf]
        %v1031 = vld [vmem:[%s6 + $0x3c] sm:$0xf]
        %v1032 = vld [vmem:[%s7] sm:$0x1]
        %v1034 = vlaneseq
        %v1035 = vshrl.u32 %v1034, 7
        %v1036 = vsub.s32 0, %v1035
        %v1037 = vrot.slane %v1032, %v1036
        %v1055 = vunpack.c.l.b16 %v1016
        %v1056 = vunpack.c.l.b16 %v1017
        %v1057 = vunpack.c.l.b16 %v1018
        %v1058 = vunpack.c.l.b16 %v1019
        %v1059 = vunpack.c.l.b16 %v1020
        %v1060 = vunpack.c.l.b16 %v1021
        %v1061 = vunpack.c.l.b16 %v1022
        %v1062 = vunpack.c.l.b16 %v1023
        %v1063 = vunpack.c.l.b16 %v1024
        %v1064 = vunpack.c.l.b16 %v1025
        %v1065 = vunpack.c.l.b16 %v1026
        %v1066 = vunpack.c.l.b16 %v1027
        %v1067 = vunpack.c.l.b16 %v1028
        %v1068 = vunpack.c.l.b16 %v1029
        %v1069 = vunpack.c.l.b16 %v1030
        %v1070 = vunpack.c.l.b16 %v1031
        %v1071 = vpack.c.b16 %v1056, %v1055
        %v1072 = vpack.c.b16 %v1058, %v1057
        %v1073 = vpack.c.b16 %v1060, %v1059
        %v1074 = vpack.c.b16 %v1062, %v1061
        %v1075 = vpack.c.b16 %v1064, %v1063
        %v1076 = vpack.c.b16 %v1066, %v1065
        %v1077 = vpack.c.b16 %v1068, %v1067
        %v1078 = vpack.c.b16 %v1070, %v1069
        %1087 = vmatprep.subr.bf16.mxu0 0
        %1088 = vmatpush1.bf16.msra.mxu0 %v1071
        %1089 = vmatprep.subr.bf16.mxu0 0
        %1090 = vmatpush1.bf16.msra.mxu0 %v1072
        %1091 = vmatprep.subr.bf16.mxu0 0
        %1092 = vmatpush1.bf16.msra.mxu0 %v1073
        %1093 = vmatprep.subr.bf16.mxu0 0
        %1094 = vmatpush1.bf16.msra.mxu0 %v1074
        %1095 = vmatprep.subr.bf16.mxu0 0
        %1096 = vmatpush1.bf16.msra.mxu0 %v1075
        %1097 = vmatprep.subr.bf16.mxu0 0
        %1098 = vmatpush1.bf16.msra.mxu0 %v1076
        %1099 = vmatprep.subr.bf16.mxu0 0
        %1100 = vmatpush1.bf16.msra.mxu0 %v1077
        %1101 = vmatprep.subr.bf16.mxu0 0
        %1102 = vmatpush1.bf16.msra.mxu0 %v1078
        %1103 = vmatprep.subr.bf16.mxu0 0
        %1104 = vmatpush1.bf16.msra.mxu0 0
        %1105 = vmatprep.subr.bf16.mxu0 0
        %1106 = vmatpush1.bf16.msra.mxu0 0
        %1107 = vmatprep.subr.bf16.mxu0 0
        %1108 = vmatpush1.bf16.msra.mxu0 0
        %1109 = vmatprep.subr.bf16.mxu0 0
        %1110 = vmatpush1.bf16.msra.mxu0 0
        %1111 = vmatprep.subr.bf16.mxu0 0
        %1112 = vmatpush1.bf16.msra.mxu0 0
        %1113 = vmatprep.subr.bf16.mxu0 0
        %1114 = vmatpush1.bf16.msra.mxu0 0
        %1115 = vmatprep.subr.bf16.mxu0 0
        %1116 = vmatpush1.bf16.msra.mxu0 0
        %1117 = vmatprep.subr.bf16.mxu0 0
        %1118 = vmatpush1.bf16.msra.mxu0 0
        %1119 = vmatprep.mubr.bf16.mxu0 0
        %1120 = vmatmul.mubr.bf16.gmra.mrb[0].mxu0 %v1015
        %v1121 = vpop.f32.mrb[0].mxu0
        %v1122 = vadd.f32 %v1037, %v1121
        %v1123 = vpop.f32.mrb[0].mxu0
        %v1124 = vpop.f32.mrb[0].mxu0
        %v1125 = vadd.f32 %v1037, %v1124
        %v1126 = vpop.f32.mrb[0].mxu0
        %1127 = vdwg.mxu0
        %v1128 = vsub.f32 %v901, %v893
        %v1129 = vsub.f32 %v902, %v896
        %v1130 = vsub.f32 %v1122, %v1128
        %v1131 = vsub.f32 %v1125, %v1129
        %v1132 = vmul.f32 %v1130, %v1130
        %v1133 = vmul.f32 %v1131, %v1131
        %v1134 = vsel %vm952, %v1132, 0.0
        %v1135 = vsel %vm952, %v1133, 0.0
        %v1136 = vadd.f32 %v1134, %v1135
        %1137 = vadd.xlane.f32.xlu0 %v1136
        %v1138 = vpop.xlane.xlu0 %1137
        %v1139 = vrot.slane %v1138, 4
        %v1140 = vadd.f32 %v1138, %v1139
        %v1141 = vrot.slane %v1140, 2
        %v1142 = vadd.f32 %v1140, %v1141
        %v1143 = vrot.slane %v1142, 1
        %v1144 = vadd.f32 %v1142, %v1143
        %s1145 = vtos %v1144
        %s1146 = smul.f32 %s1145, 0.00048828125
        %v1147 = vstv %s1146
        %1148 = vst [vmem:[%s332] sm:$0xff] %v1147
        %s1149 = sand.u32 %s216, 1
        %s1150 = scalar_lea.sflag [#allocation5], %s1149
        %s1151 = sand.u32 %s216, 1
        %s1152 = smul.addr %s1151, 8
        %s1153 = scalar_lea.vmem [#allocation4], %s1152
        // Predicated region
        $region49: #{tpu_custom_call.1} parent=47 // pred_check
          %p1154 = pneg %p226
        $region50: #{tpu_custom_call.1} parent=47 // pred_check_branch
          %1156 = sbr.rel (%p1154) target = $region52
        $region51: #{tpu_custom_call.1} parent=47 // pred_region
          %s1157 = sadd.s32 %s32, %s33
          %s1159 = ssub.s32 128, 128
          %1160 = vsyncadd %s1150, %s1159
          %s1161 = smul.addr %s1157, 128
          %s1162 = scalar_lea.hbm %s8, %s1161
          %s1164 = sshll.u32 %s1153, 4
          %s1165 = int_to_ptr.vmem [resolvable:$true] %s1164
          %1167 = dma.vmem_to_hbm [thread:$0]  %s1165, 128, %s1162, %s1150
        $region52: #{tpu_custom_call.1} parent=47 // pred_fallthru
          _
      $region48: #{tpu_custom_call.1} parent=5 // pred_fallthru
        _
      %p1168 = scmp.le.s32.totalorder 2, %s23
      // Predicated region
      $region53: #{tpu_custom_call.1} parent=5 // pred_check
        %p1169 = pneg %p1168
      $region54: #{tpu_custom_call.1} parent=5 // pred_check_branch
        %1171 = sbr.rel (%p1169) target = $region56
      $region55: #{tpu_custom_call.1} parent=5 // pred_region
        %s1172 = ssub.s32 %s23, 2
        // Predicated region
        $region57: #{tpu_custom_call.1} parent=55 // pred_check
          %p1173 = pneg %p232
        $region58: #{tpu_custom_call.1} parent=55 // pred_check_branch
          %1175 = sbr.rel (%p1173) target = $region60
        $region59: #{tpu_custom_call.1} parent=55 // pred_region
          %s1176 = sand.u32 %s217, 1
          %s1177 = scalar_lea.sflag [#allocation5], %s1176
          %s1178 = sand.u32 %s217, 1
          %s1179 = smul.addr %s1178, 8
          %s1180 = scalar_lea.vmem [#allocation4], %s1179
          %1181 = dma.done %s1177, 128
        $region60: #{tpu_custom_call.1} parent=55 // pred_fallthru
          _
      $region56: #{tpu_custom_call.1} parent=5 // pred_fallthru
        _
    $region6: #{tpu_custom_call.1} parent=1 // loop_footer
      %s27 = sadd.s32 1, %s23
    $region7: #{tpu_custom_call.1} parent=1 // loop_footer_branch
      %22 = sbr.rel target = $region3
    $region8: #{tpu_custom_call.1} parent=1 // loop_exit
      _
    %1182 = vsyncpa [#allocation5], 1
    %s1183 = scalar_lea.sflag [#allocation5], 1
    %1184 = vsyncpa %s1183, 1

</llo_original>
